<compile_context>
chip_gen: v5e
topology: v5e:2x2
jax: 0.10.0
libtpu: 0.0.40
codegen_flags: <defaults>
</compile_context>

<pallas_src>
import functools

import jax
import jax.numpy as jnp
from jax.experimental import pallas as pl
from jax.experimental.pallas import tpu as pltpu


_NEG_BIG = -1e30  # pad-column mask (kept in f32; exp(-1e30 - m) == 0)


def _head_kernel(x_ref, w_ref, b_ref, o_ref):
    # x_ref: (TB, C)  w_ref: (C, Np)  b_ref: (1, Np)  o_ref: (TB, Np)
    logits = jnp.dot(
        x_ref[...], w_ref[...], preferred_element_type=jnp.float32
    ) + b_ref[...]
    # numerically-stable softmax over the (padded, lane-dense) class axis
    m = jnp.max(logits, axis=-1, keepdims=True)
    e = jnp.exp(logits - m)
    denom = jnp.sum(e, axis=-1, keepdims=True)
    # approx=True -> EUP vrcp slot (otherwise idle); softmax tolerates it.
    o_ref[...] = (e * pl.reciprocal(denom, approx=True)).astype(o_ref.dtype)


def prepare_head_params(weight, bias, *, compute_dtype=jnp.bfloat16):
    """One-time parameter prep (hoisted out of the per-step forward).

    weight: (N, C), bias: (N,) ->
      w_t:   (C, n_pad) in compute_dtype (class axis padded to a multiple of 128)
      b_row: (1, n_pad) f32 bias doubling as the pad mask (-1e30 on pad columns).
    """
    N, C = weight.shape
    n_pad = max(128, pl.cdiv(N, 128) * 128)
    w_t = (
        jnp.zeros((C, n_pad), compute_dtype)
        .at[:, :N]
        .set(weight.T.astype(compute_dtype))
    )
    # MUST stay float32: -1e30 overflows bf16 to -inf and would NaN the softmax.
    b_row = (
        jnp.full((1, n_pad), _NEG_BIG, jnp.float32)
        .at[0, :N]
        .set(bias.astype(jnp.float32))
    )
    return w_t, b_row


def _pick_batch_tile(B, pack, max_tile=512):
    """Batch tile rounded to sublane packing, capped, with >= 2 grid steps
    whenever the batch is large enough (v7x: both TensorCores get work)."""
    b_req = pl.cdiv(B, pack) * pack
    if b_req <= pack:
        return pack
    return min(max_tile, pl.cdiv(pl.cdiv(b_req, 2), pack) * pack)


def classification_head_prepared(
    x, w_t, b_row, num_classes, *, max_tile_b=512, unpad=True, out_dtype=None
):
    """Hot path: softmax(x @ W^T + b). Params must come from prepare_head_params."""
    B, C = x.shape
    cd = w_t.dtype
    n_pad = w_t.shape[1]
    od = out_dtype if out_dtype is not None else x.dtype
    x_item = jnp.dtype(cd).itemsize
    o_item = jnp.dtype(od).itemsize
    pack = max(8, 32 // x_item)  # f32 -> 8, bf16 -> 16, int8 -> 32

    tb = _pick_batch_tile(B, pack, max_tile_b)
    b_pad = pl.cdiv(B, tb) * tb

    x_c = x.astype(cd)
    if b_pad != B:  # only pay the padding copy when actually needed
        x_c = jnp.zeros((b_pad, C), cd).at[:B, :].set(x_c)

    # VMEM footprint: double-buffered x/out stream + grid-invariant W^T/bias.
    vmem_bytes = (
        2 * tb * C * x_item
        + 2 * C * n_pad * x_item
        + 2 * n_pad * 4
        + 2 * tb * n_pad * o_item
    )
    cp_kwargs = dict(dimension_semantics=("parallel",))  # megacore on v7x; ~free elsewhere
    if vmem_bytes > (12 << 20):  # would overshoot v5e's 16 MiB scoped default
        cp_kwargs["vmem_limit_bytes"] = min(int(vmem_bytes) + (8 << 20), 64 << 20)

    out = pl.pallas_call(
        _head_kernel,
        out_shape=jax.ShapeDtypeStruct((b_pad, n_pad), od),
        grid=(b_pad // tb,),
        in_specs=[
            pl.BlockSpec((tb, C), lambda i: (i, 0)),      # x: streamed per tile
            # W^T / bias are grid-invariant -> stay VMEM-resident.
            # TODO(synk): mark Buffered(1) + add an N-tiled online-softmax axis
            # once a large-num_classes (ImageNet-style) head is needed.
            pl.BlockSpec((C, n_pad), lambda i: (0, 0)),
            pl.BlockSpec((1, n_pad), lambda i: (0, 0)),
        ],
        out_specs=pl.BlockSpec((tb, n_pad), lambda i: (i, 0)),
        compiler_params=pltpu.CompilerParams(**cp_kwargs),
        cost_estimate=pl.CostEstimate(
            flops=2 * b_pad * C * n_pad,
            transcendentals=b_pad * n_pad,
            bytes_accessed=(
                b_pad * C * x_item
                + C * n_pad * x_item
                + n_pad * 4
                + b_pad * n_pad * o_item
            ),
        ),
    )(x_c, w_t, b_row)

    if not unpad or (b_pad == B and n_pad == num_classes):
        return out
    return out[:B, :num_classes]


def classification_head(x, weight, bias, *, compute_dtype=jnp.bfloat16, **kw):
    """Convenience one-shot API (prep + forward). Prefer prepare_head_params +
    classification_head_prepared for per-step inference."""
    w_t, b_row = prepare_head_params(weight, bias, compute_dtype=compute_dtype)
    return classification_head_prepared(x, w_t, b_row, weight.shape[0], **kw)


def init_params(key, in_channels, num_classes):
    # Mirror torch nn.Linear default init: U(-1/sqrt(in), 1/sqrt(in))
    kw, kb = jax.random.split(key)
    bound = 1.0 / jnp.sqrt(jnp.float32(in_channels))
    weight = jax.random.uniform(
        kw, (num_classes, in_channels), jnp.float32, -bound, bound
    )
    bias = jax.random.uniform(kb, (num_classes,), jnp.float32, -bound, bound)
    return weight, bias


if __name__ == "__main__":
    key = jax.random.PRNGKey(0)
    kx, kp = jax.random.split(key)

    batch = 8
    in_channels = 32   # small stand-in for 384
    num_classes = 2

    x = jax.random.normal(kx, (batch, in_channels), jnp.float32)
    weight, bias = init_params(kp, in_channels, num_classes)

    ref = jax.nn.softmax(x @ weight.T + bias, axis=-1)

    # Hot path: prep params once, reuse the jitted forward (bf16 data path).
    w_t, b_row = prepare_head_params(weight, bias, compute_dtype=jnp.bfloat16)
    fwd = jax.jit(
        functools.partial(
            classification_head_prepared,
            num_classes=num_classes,
            out_dtype=jnp.float32,
        )
    )
    out_bf16 = jax.block_until_ready(fwd(x, w_t, b_row))
    assert out_bf16.shape == (batch, num_classes)
    assert jnp.allclose(out_bf16, ref, atol=3e-2, rtol=3e-2), float(
        jnp.max(jnp.abs(out_bf16 - ref))
    )

    # f32 path (tighter tolerance; only approx-reciprocal error remains).
    out_f32 = jax.block_until_ready(
        classification_head(x, weight, bias, compute_dtype=jnp.float32)
    )
    assert out_f32.shape == (batch, num_classes)
    assert jnp.allclose(out_f32, ref, atol=2e-3, rtol=2e-3), float(
        jnp.max(jnp.abs(out_f32 - ref))
    )

    print("KERNEL_OK")
</pallas_src>

<mosaic_0001>
module attributes {stable_mosaic.version = 11 : i64} {
  func.func @_head_kernel(%arg0: i32, %arg1: memref<16x32xbf16, #tpu.memory_space<vmem>>, %arg2: memref<32x128xbf16, #tpu.memory_space<vmem>>, %arg3: memref<1x128xf32, #tpu.memory_space<vmem>>, %arg4: memref<16x128xf32, #tpu.memory_space<vmem>>) attributes {dimension_semantics = [#tpu.dimension_semantics<parallel>], iteration_bounds = array<i64: 1>, scalar_prefetch = 0 : i64, scratch_operands = 0 : i64, tpu.core_type = #tpu.core_type<tc>, window_params = [{transform_indices = @transform_0, window_bounds = array<i64: 16, 32>}, {pipeline_mode = #tpu.pipeline_mode<synchronous>, transform_indices = @transform_1, window_bounds = array<i64: 32, 128>}, {pipeline_mode = #tpu.pipeline_mode<synchronous>, transform_indices = @transform_2, window_bounds = array<i64: 1, 128>}, {transform_indices = @transform_3, window_bounds = array<i64: 16, 128>}]} {
    %c0 = arith.constant 0 : index
    %c0_0 = arith.constant 0 : index
    %0 = vector.load %arg1[%c0, %c0_0] : memref<16x32xbf16, #tpu.memory_space<vmem>>, vector<16x32xbf16>
    %c0_1 = arith.constant 0 : index
    %c0_2 = arith.constant 0 : index
    %1 = vector.load %arg2[%c0_1, %c0_2] : memref<32x128xbf16, #tpu.memory_space<vmem>>, vector<32x128xbf16>
    %cst = arith.constant dense<0.000000e+00> : vector<16x128xf32>
    %2 = tpu.matmul %0, %1, %cst {dimension_numbers = #tpu.dot_dimension_numbers<[1], [0], [0], [1], [0, 0, 1, 1], [], []>} : vector<16x32xbf16>, vector<32x128xbf16>, vector<16x128xf32> -> vector<16x128xf32>
    %c0_3 = arith.constant 0 : index
    %c0_4 = arith.constant 0 : index
    %3 = vector.load %arg3[%c0_3, %c0_4] : memref<1x128xf32, #tpu.memory_space<vmem>>, vector<1x128xf32>
    %4 = vector.broadcast %3 : vector<1x128xf32> to vector<16x128xf32>
    %5 = arith.addf %2, %4 : vector<16x128xf32>
    %cst_5 = arith.constant dense<0xFF800000> : vector<16xf32>
    %6 = vector.multi_reduction <maximumf>, %5, %cst_5 [1] : vector<16x128xf32> to vector<16xf32>
    %7 = vector.shape_cast %6 : vector<16xf32> to vector<16x1xf32>
    %8 = vector.broadcast %7 : vector<16x1xf32> to vector<16x128xf32>
    %9 = arith.subf %5, %8 : vector<16x128xf32>
    %10 = math.exp %9 : vector<16x128xf32>
    %cst_6 = arith.constant dense<0.000000e+00> : vector<16xf32>
    %11 = vector.multi_reduction <add>, %10, %cst_6 [1] : vector<16x128xf32> to vector<16xf32>
    %12 = vector.shape_cast %11 : vector<16xf32> to vector<16x1xf32>
    %13 = tpu.reciprocal %12 {approx = true} : vector<16x1xf32> -> vector<16x1xf32>
    %14 = vector.broadcast %13 : vector<16x1xf32> to vector<16x128xf32>
    %15 = arith.mulf %10, %14 : vector<16x128xf32>
    %c0_7 = arith.constant 0 : index
    %c0_8 = arith.constant 0 : index
    %16 = vector.load %arg4[%c0_7, %c0_8] : memref<16x128xf32, #tpu.memory_space<vmem>>, vector<16x128xf32>
    tpu.vector_store %arg4[%c0_7, %c0_8], %15 {strides = array<i32>} : memref<16x128xf32, #tpu.memory_space<vmem>>, vector<16x128xf32>,
    return
  }
  func.func @transform_0(%arg0: i32) -> (i32, i32) {
    %c0_i32 = arith.constant 0 : i32
    %c0_i32_0 = arith.constant 0 : i32
    return %arg0, %c0_i32 : i32, i32
  }
  func.func @transform_1(%arg0: i32) -> (i32, i32) {
    %c0_i32 = arith.constant 0 : i32
    %c0_i32_0 = arith.constant 0 : i32
    %c0_i32_1 = arith.constant 0 : i32
    return %c0_i32, %c0_i32_0 : i32, i32
  }
  func.func @transform_2(%arg0: i32) -> (i32, i32) {
    %c0_i32 = arith.constant 0 : i32
    %c0_i32_0 = arith.constant 0 : i32
    %c0_i32_1 = arith.constant 0 : i32
    return %c0_i32, %c0_i32_0 : i32, i32
  }
  func.func @transform_3(%arg0: i32) -> (i32, i32) {
    %c0_i32 = arith.constant 0 : i32
    %c0_i32_0 = arith.constant 0 : i32
    return %arg0, %c0_i32 : i32, i32
  }
}

</mosaic_0001>

<llo_original>
// kernel: classification_head_prepared.1
$region0: #{classification_head_prepared.1}
  #allocation0 [shape = 'u32[]', space=smem, size = 0x4, offset = 0x4, fixed_abs, tag = 'smem constant byte address 0x4 - core index']
  #allocation1 [shape = 'u32[72,128]{1,0:T(1,128)}', space=vmem, size = 0x9000, scoped, tag = 'internal scratch']
  %s0 = inlined_call_operand.vmem [shape: bf16[16,32], index: 0, kind: input, shape index: {}]
  %s1 = inlined_call_operand.vmem [shape: bf16[32,128], index: 1, kind: input, shape index: {}]
  %s2 = inlined_call_operand.vmem [shape: f32[1,128], index: 2, kind: input, shape index: {}]
  %s3 = inlined_call_operand.vmem [shape: f32[16,128], index: 3, kind: output, shape index: {}]
  %s4 = sld [smem:[#allocation0]]
  $region22: #{classification_head_prepared.1} parent=0
    _
  %s6 = ssub.s32 1, %s4
  %s7 = scalar_select 0, %s6, %s4
  // Predicated region
  $region2: #{classification_head_prepared.1} parent=0 // pred_check
    _
  $region3: #{classification_head_prepared.1} parent=0 // pred_check_branch
    %9 = sbr.rel (0) target = $region5
  $region4: #{classification_head_prepared.1} parent=0 // pred_region
    _
  $region5: #{classification_head_prepared.1} parent=0 // pred_fallthru
    _
  // Predicated region
  $region6: #{classification_head_prepared.1} parent=0 // pred_check
    _
  $region7: #{classification_head_prepared.1} parent=0 // pred_check_branch
    %11 = sbr.rel (0) target = $region9
  $region8: #{classification_head_prepared.1} parent=0 // pred_region
    _
  $region9: #{classification_head_prepared.1} parent=0 // pred_fallthru
    _
  // Predicated region
  $region10: #{classification_head_prepared.1} parent=0 // pred_check
    _
  $region11: #{classification_head_prepared.1} parent=0 // pred_check_branch
    %13 = sbr.rel (0) target = $region13
  $region12: #{classification_head_prepared.1} parent=0 // pred_region
    _
  $region13: #{classification_head_prepared.1} parent=0 // pred_fallthru
    _
  %v15 = vld [vmem:[%s0] sm:$0xf]
  %v16 = vld [vmem:[%s0 + $0x4] sm:$0xf]
  %v17 = vld [vmem:[%s1] sm:$0xf]
  %v18 = vld [vmem:[%s1 + $0x4] sm:$0xf]
  %v19 = vld [vmem:[%s1 + $0x8] sm:$0xf]
  %v20 = vld [vmem:[%s1 + $0xc] sm:$0xf]
  %v21 = vld [vmem:[%s2] sm:$0x1]
  %v23 = vperm.slane %v21, 0
  %v27 = vunpack.c.l.b16 %v15
  %v28 = vunpack.c.l.b16 %v16
  %v29 = vpack.c.b16 %v28, %v27
  %v34 = vunpack.c.l.b16 %v17
  %v35 = vunpack.c.l.b16 %v18
  %v36 = vunpack.c.l.b16 %v19
  %v37 = vunpack.c.l.b16 %v20
  %v38 = vpack.c.b16 %v35, %v34
  %v39 = vpack.c.b16 %v37, %v36
  %vm42 = vcmask 261120
  %v44 = vsel %vm42, %v29, 0
  %46 = vmatpush.bf16.msra.mxu0 0
  %47 = vmatpush.bf16.msra.mxu0 0
  %48 = vmatpush.bf16.msra.mxu0 0
  %49 = vmatpush.bf16.msra.mxu0 0
  %50 = vmatpush.bf16.msra.mxu0 0
  %51 = vmatpush.bf16.msra.mxu0 0
  %52 = vmatpush.bf16.msra.mxu0 %v39
  %53 = vmatpush.bf16.msra.mxu0 %v38
  %54 = vmatmul.bf16.gmra.mxu0 %v44
  %v55 = vpop.f32.mrf.mxu0
  %v56 = vadd.f32 %v23, %v55
  %v57 = vpop.f32.mrf.mxu0
  %v58 = vadd.f32 %v23, %v57
  %59 = vdwg.mxu0
  %60 = vmax.xlane.f32.xlu0 %v56
  %v61 = vpop.xlane.xlu0 %60
  %62 = vmax.xlane.f32.xlu0 %v58
  %v63 = vpop.xlane.xlu0 %62
  %v64 = vsub.f32 %v56, %v61
  %v65 = vsub.f32 %v58, %v63
  %v66 = vmul.f32 %v64, 1.442695
  %v67 = vpow.pop %v66
  %v68 = vmul.f32 %v65, 1.442695
  %v69 = vpow.pop %v68
  %70 = vadd.xlane.f32.xlu0 %v67
  %v71 = vpop.xlane.xlu0 %70
  %72 = vadd.xlane.f32.xlu0 %v69
  %v73 = vpop.xlane.xlu0 %72
  %v74 = vrcp.pop %v71
  %v75 = vrcp.pop %v73
  %v76 = vmul.f32 %v67, %v74
  %v77 = vmul.f32 %v69, %v75
  %78 = vst [vmem:[%s3] sm:$0xff] %v76
  %79 = vst [vmem:[%s3 + $0x8] sm:$0xff] %v77
  // Predicated region
  $region14: #{classification_head_prepared.1} parent=0 // pred_check
    _
  $region15: #{classification_head_prepared.1} parent=0 // pred_check_branch
    %81 = sbr.rel (0) target = $region17
  $region16: #{classification_head_prepared.1} parent=0 // pred_region
    _
  $region17: #{classification_head_prepared.1} parent=0 // pred_fallthru
    _
  // Predicated region
  $region18: #{classification_head_prepared.1} parent=0 // pred_check
    _
  $region19: #{classification_head_prepared.1} parent=0 // pred_check_branch
    %83 = sbr.rel (0) target = $region21
  $region20: #{classification_head_prepared.1} parent=0 // pred_region
    _
  $region21: #{classification_head_prepared.1} parent=0 // pred_fallthru
    _

</llo_original>
